<compile_context>
chip_gen: v6e
topology: v6e:2x2x1
jax: 0.10.0
libtpu: 0.0.40
codegen_flags: <defaults>
</compile_context>

<pallas_src>
import functools

import jax
import jax.numpy as jnp
from jax.experimental import pallas as pl
from jax.experimental.pallas import tpu as pltpu

LANES = 128


def _cdiv(a, b):
    return -(-a // b)


def _round_up(a, m):
    return _cdiv(a, m) * m


def _round_down(a, m):
    return (a // m) * m


def _chip_params():
    """(num_slices, max_tile_rows) for the current TPU generation.

    num_slices    : leading "parallel" grid axis -- 2 only on v7x (2 TCs/chip);
                    on single-TensorCore chips a 2-way split is pure overhead.
    max_tile_rows : 8192 rows x 128 lanes x 4 B = 4 MiB/input tile -> 16 MiB
                    double-buffered working set (fits the 32 MiB scoped-VMEM
                    default on v6e/v7x); capped at 4096 rows (8 MiB working
                    set) on v5e/unknown chips whose scoped default is 16 MiB.
    """
    try:
        kind = jax.devices()[0].device_kind.lower()
    except Exception:  # defensive: never let detection break the kernel
        kind = ""
    if "v7" in kind or "7x" in kind:
        return 2, 8192
    if "v6" in kind:
        return 1, 8192
    return 1, 4096


def _sublane_multiple(*dtypes):
    """Second-minor tiling multiple: 8 (4-byte), 16 (2-byte), 32 (1-byte)."""
    m = 8
    for dt in dtypes:
        m = max(m, 32 // max(1, jnp.dtype(dt).itemsize))
    return m


def _mae_sum_kernel(pred_ref, targ_ref, out_ref, acc_ref, *,
                    tile_rows, steps_per_slice, rows_total, needs_mask):
    """Accumulates sum(|pred - targ|) for one reduction slice.

    acc_ref : VMEM (8, 128) f32 vector accumulator (persists across the
              'arbitrary' reduction axis).
    out_ref : SMEM (1, 1) per-slice partial sum.
    """
    c = pl.program_id(0)          # slice ("parallel" axis)
    i = pl.program_id(1)          # reduction step within the slice

    @pl.when(i == 0)
    def _():
        acc_ref[...] = jnp.zeros_like(acc_ref)

    diff = jnp.abs(pred_ref[...].astype(jnp.float32)
                   - targ_ref[...].astype(jnp.float32))

    def _fold(x):
        # (tile_rows, 128) -> (8, 128) with plain VPU adds (no cross-lane
        # movement); last two dims match the native vreg tile so the reshape
        # is layout-free.
        return x.reshape(tile_rows // 8, 8, LANES).sum(axis=0)

    if needs_mask:
        # Only the (single) boundary step pays the iota/cmp/select mask;
        # interior steps take the bare 3-op VPU path.
        row_start = (c * steps_per_slice + i) * tile_rows
        is_interior = row_start + tile_rows <= rows_total

        @pl.when(is_interior)
        def _():
            acc_ref[...] += _fold(diff)

        @pl.when(jnp.logical_not(is_interior))
        def _():
            row_idx = row_start + jax.lax.broadcasted_iota(
                jnp.int32, diff.shape, 0)
            acc_ref[...] += _fold(
                jnp.where(row_idx < rows_total, diff, jnp.float32(0.0)))
    else:
        acc_ref[...] += _fold(diff)

    @pl.when(i == steps_per_slice - 1)
    def _():
        out_ref[0, 0] = jnp.sum(acc_ref[...])   # one cross-lane reduce / slice


def loss_mae(pred, target):
    """mean(|pred - target|) over all elements (matches torch .abs().mean())."""
    assert pred.shape == target.shape
    n_elems = pred.size
    out_dtype = jnp.result_type(pred.dtype, target.dtype)

    flat_p = pred.reshape(-1)
    flat_t = target.reshape(-1)

    sublane = _sublane_multiple(pred.dtype, target.dtype)
    rows = n_elems // LANES
    if rows < sublane:
        # Tiny input: not worth a kernel launch.
        d = flat_p.astype(jnp.float32) - flat_t.astype(jnp.float32)
        return jnp.mean(jnp.abs(d)).astype(out_dtype)

    n_main = rows * LANES
    rem = n_elems - n_main

    # < 128-element lane tail: tiny, handled in plain JAX so the kernel path
    # needs no padding copy.
    tail_sum = jnp.float32(0.0)
    if rem:
        tail_sum = jnp.sum(jnp.abs(flat_p[n_main:].astype(jnp.float32)
                                   - flat_t[n_main:].astype(jnp.float32)))

    # When rem == 0 these are copy-free reshapes of the original buffers.
    # TODO(synk): for very large ragged inputs (rem != 0) XLA may materialize
    # the sliced prefix; stream the full flat arrays with memory_space=pl.ANY
    # + manual DMA if xprof shows that copy dominating.
    p2 = flat_p[:n_main].reshape(rows, LANES)
    t2 = flat_t[:n_main].reshape(rows, LANES)

    want_slices, max_tile_rows = _chip_params()

    tile_rows = max(sublane, min(max_tile_rows, _round_down(rows, sublane)))
    steps_total = _cdiv(rows, tile_rows)
    num_slices = min(want_slices, steps_total)
    if steps_total % num_slices != 0:
        # Rebalance so the step count divides evenly across slices -- no
        # phantom steps issuing dead duplicate DMAs.
        steps_even = _round_up(steps_total, num_slices)
        tile_even = _round_up(_cdiv(rows, steps_even), sublane)
        if _cdiv(rows, tile_even) == steps_even:
            tile_rows, steps_total = tile_even, steps_even
        else:
            num_slices = 1
    steps_per_slice = steps_total // num_slices
    # Only the global last block can extend past the slab (no phantom steps).
    needs_mask = steps_total * tile_rows != rows

    kernel = functools.partial(
        _mae_sum_kernel,
        tile_rows=tile_rows,
        steps_per_slice=steps_per_slice,
        rows_total=rows,
        needs_mask=needs_mask,
    )

    def in_index_map(c, i):
        return (c * steps_per_slice + i, 0)

    partials = pl.pallas_call(
        kernel,
        out_shape=jax.ShapeDtypeStruct((num_slices, 1), jnp.float32),
        grid_spec=pltpu.PrefetchScalarGridSpec(
            num_scalar_prefetch=0,
            grid=(num_slices, steps_per_slice),
            in_specs=[
                pl.BlockSpec((tile_rows, LANES), in_index_map),
                pl.BlockSpec((tile_rows, LANES), in_index_map),
            ],
            out_specs=pl.BlockSpec((1, 1), lambda c, i: (c, 0),
                                   memory_space=pltpu.SMEM),
            scratch_shapes=[pltpu.VMEM((8, LANES), jnp.float32)],
        ),
        compiler_params=pltpu.CompilerParams(
            dimension_semantics=("parallel", "arbitrary"),
        ),
    )(p2, t2)

    total = jnp.sum(partials) + tail_sum
    return (total / jnp.float32(n_elems)).astype(out_dtype)

    # TODO(synk): backward() (i.e. (pred-target).sign()) is not part of the
    # requested forward pass and is not implemented here.


if __name__ == "__main__":
    key = jax.random.PRNGKey(0)
    k1, k2, k3, k4, k5, k6 = jax.random.split(key, 6)

    # Primary test: small NCHW prediction/target pair (numel % 128 == 0).
    pred = jax.random.normal(k1, (2, 4, 16, 16), dtype=jnp.float32)
    target = jax.random.normal(k2, (2, 4, 16, 16), dtype=jnp.float32)
    result = loss_mae(pred, target)
    jax.block_until_ready(result)
    ref = jnp.mean(jnp.abs(pred - target))
    assert jnp.allclose(result, ref, rtol=1e-5, atol=1e-6), (result, ref)

    # Ragged-shape test: exercises the boundary-only in-kernel row mask and
    # the plain-JAX lane tail.
    pred2 = jax.random.normal(k3, (2, 3, 15, 17), dtype=jnp.float32)
    target2 = jax.random.normal(k4, (2, 3, 15, 17), dtype=jnp.float32)
    result2 = loss_mae(pred2, target2)
    jax.block_until_ready(result2)
    ref2 = jnp.mean(jnp.abs(pred2 - target2))
    assert jnp.allclose(result2, ref2, rtol=1e-5, atol=1e-6), (result2, ref2)

    # bf16 test: exercises the dtype-aware sublane rounding (multiple of 16).
    pred3 = jax.random.normal(k5, (2, 16, 16, 16), dtype=jnp.bfloat16)
    target3 = jax.random.normal(k6, (2, 16, 16, 16), dtype=jnp.bfloat16)
    result3 = loss_mae(pred3, target3)
    jax.block_until_ready(result3)
    ref3 = jnp.mean(jnp.abs(pred3.astype(jnp.float32)
                            - target3.astype(jnp.float32)))
    assert jnp.allclose(result3.astype(jnp.float32), ref3,
                        rtol=2e-2, atol=1e-2), (result3, ref3)

    print("KERNEL_OK")
</pallas_src>

<mosaic_0001>
module attributes {stable_mosaic.version = 11 : i64} {
  func.func @_mae_sum_kernel(%arg0: i32, %arg1: i32, %arg2: memref<16x128xf32, #tpu.memory_space<vmem>>, %arg3: memref<16x128xf32, #tpu.memory_space<vmem>>, %arg4: memref<1x1xf32, #tpu.memory_space<smem>>, %arg5: memref<8x128xf32, #tpu.memory_space<vmem>>) attributes {dimension_semantics = [#tpu.dimension_semantics<parallel>, #tpu.dimension_semantics<arbitrary>], iteration_bounds = array<i64: 1, 1>, scalar_prefetch = 0 : i64, scratch_operands = 1 : i64, tpu.core_type = #tpu.core_type<tc>, window_params = [{transform_indices = @transform_0, window_bounds = array<i64: 16, 128>}, {transform_indices = @transform_1, window_bounds = array<i64: 16, 128>}, {transform_indices = @transform_2, window_bounds = array<i64: 1, 1>}]} {
    %c0_i32 = arith.constant 0 : i32
    %0 = arith.cmpi eq, %arg1, %c0_i32 : i32
    %1 = arith.extui %0 : i1 to i32
    %c0_i32_0 = arith.constant 0 : i32
    %2 = arith.cmpi ne, %1, %c0_i32_0 : i32
    scf.if %2 {
      %cst_10 = arith.constant 0.000000e+00 : f32
      %15 = vector.broadcast %cst_10 : f32 to vector<8x128xf32>
      %c0_11 = arith.constant 0 : index
      %c0_12 = arith.constant 0 : index
      %16 = vector.load %arg5[%c0_11, %c0_12] : memref<8x128xf32, #tpu.memory_space<vmem>>, vector<8x128xf32>
      tpu.vector_store %arg5[%c0_11, %c0_12], %15 {strides = array<i32>} : memref<8x128xf32, #tpu.memory_space<vmem>>, vector<8x128xf32>,
    } else {
    }
    %c0 = arith.constant 0 : index
    %c0_1 = arith.constant 0 : index
    %3 = vector.load %arg2[%c0, %c0_1] : memref<16x128xf32, #tpu.memory_space<vmem>>, vector<16x128xf32>
    %c0_2 = arith.constant 0 : index
    %c0_3 = arith.constant 0 : index
    %4 = vector.load %arg3[%c0_2, %c0_3] : memref<16x128xf32, #tpu.memory_space<vmem>>, vector<16x128xf32>
    %5 = arith.subf %3, %4 : vector<16x128xf32>
    %6 = math.absf %5 : vector<16x128xf32>
    %c0_4 = arith.constant 0 : index
    %c0_5 = arith.constant 0 : index
    %7 = vector.load %arg5[%c0_4, %c0_5] : memref<8x128xf32, #tpu.memory_space<vmem>>, vector<8x128xf32>
    %8 = vector.shape_cast %6 : vector<16x128xf32> to vector<2x8x128xf32>
    %cst = arith.constant dense<0.000000e+00> : vector<8x128xf32>
    %9 = vector.multi_reduction <add>, %8, %cst [0] : vector<2x8x128xf32> to vector<8x128xf32>
    %10 = arith.addf %7, %9 : vector<8x128xf32>
    %c0_6 = arith.constant 0 : index
    %c0_7 = arith.constant 0 : index
    %11 = vector.load %arg5[%c0_6, %c0_7] : memref<8x128xf32, #tpu.memory_space<vmem>>, vector<8x128xf32>
    tpu.vector_store %arg5[%c0_6, %c0_7], %10 {strides = array<i32>} : memref<8x128xf32, #tpu.memory_space<vmem>>, vector<8x128xf32>,
    %c0_i32_8 = arith.constant 0 : i32
    %12 = arith.cmpi eq, %arg1, %c0_i32_8 : i32
    %13 = arith.extui %12 : i1 to i32
    %c0_i32_9 = arith.constant 0 : i32
    %14 = arith.cmpi ne, %13, %c0_i32_9 : i32
    scf.if %14 {
      %c0_10 = arith.constant 0 : index
      %c0_11 = arith.constant 0 : index
      %15 = vector.load %arg5[%c0_10, %c0_11] : memref<8x128xf32, #tpu.memory_space<vmem>>, vector<8x128xf32>
      %16 = vector.shape_cast %15 : vector<8x128xf32> to vector<1x8x128xf32>
      %cst_12 = arith.constant dense<0.000000e+00> : vector<1xf32>
      %17 = vector.multi_reduction <add>, %16, %cst_12 [1, 2] : vector<1x8x128xf32> to vector<1xf32>
      %18 = vector.shape_cast %17 : vector<1xf32> to vector<1x1x1xf32>
      %19 = vector.extract %18[0, 0, 0] : f32 from vector<1x1x1xf32>
      %c0_13 = arith.constant 0 : index
      %c0_14 = arith.constant 0 : index
      %20 = memref.load %arg4[%c0_13, %c0_14] : memref<1x1xf32, #tpu.memory_space<smem>>
      memref.store %19, %arg4[%c0_13, %c0_14] : memref<1x1xf32, #tpu.memory_space<smem>>
    } else {
    }
    return
  }
  func.func @transform_0(%arg0: i32, %arg1: i32) -> (i32, i32) {
    %c1_i32 = arith.constant 1 : i32
    %0 = arith.muli %arg0, %c1_i32 : i32
    %1 = arith.addi %0, %arg1 : i32
    %c0_i32 = arith.constant 0 : i32
    %c0_i32_0 = arith.constant 0 : i32
    return %1, %c0_i32 : i32, i32
  }
  func.func @transform_1(%arg0: i32, %arg1: i32) -> (i32, i32) {
    %c1_i32 = arith.constant 1 : i32
    %0 = arith.muli %arg0, %c1_i32 : i32
    %1 = arith.addi %0, %arg1 : i32
    %c0_i32 = arith.constant 0 : i32
    %c0_i32_0 = arith.constant 0 : i32
    return %1, %c0_i32 : i32, i32
  }
  func.func @transform_2(%arg0: i32, %arg1: i32) -> (i32, i32) {
    %c0_i32 = arith.constant 0 : i32
    %c0_i32_0 = arith.constant 0 : i32
    return %arg0, %c0_i32 : i32, i32
  }
}

</mosaic_0001>

<llo_original>
// kernel: tpu_custom_call.1
$region0: #{tpu_custom_call.1}
  #allocation0 [shape = 'u32[]', space=smem, size = 0x4, offset = 0x4, fixed_abs, tag = 'smem constant byte address 0x4 - core index']
  #allocation1 [shape = 'u32[144,128]{1,0:T(1,128)}', space=vmem, size = 0x12000, scoped, tag = 'internal scratch']
  #allocation2 [shape = 'f32[8,128]{1,0:T(8,128)}', space=vmem, size = 0x1000, scoped, tag = 'scratch operand']
  %s0 = inlined_call_operand.hbm [shape: f32[16,128], index: 0, kind: input, shape index: {}]
  %s1 = inlined_call_operand.hbm [shape: f32[16,128], index: 1, kind: input, shape index: {}]
  %s2 = inlined_call_operand.hbm [shape: f32[1,1], index: 2, kind: output, shape index: {}]
  %s3 = sld [smem:[#allocation0]]
  $region34: #{tpu_custom_call.1} parent=0
    _
  %s5 = ssub.s32 1, %s3
  %s6 = scalar_select 0, %s5, %s3
  $region1: #{tpu_custom_call.1} parent=0
    #allocation3 [shape = 'u8[8192]{0}', space=vmem, size = 0x2000, scoped, tag = 'input window, operand 0, single buffered']
    #allocation4 [shape = 's32[1]{0}', space=sflag, size = 0x4, scoped, tag = 'scoped memory for tpu_custom_call.1']
    #allocation5 [shape = 's32[1]{0}', space=sflag, size = 0x4, scoped, tag = 'scoped memory for tpu_custom_call.1']
    #allocation6 [shape = 'u8[8192]{0}', space=vmem, size = 0x2000, scoped, tag = 'input window, operand 1, single buffered']
    #allocation7 [shape = 's32[1]{0}', space=sflag, size = 0x4, scoped, tag = 'scoped memory for tpu_custom_call.1']
    #allocation8 [shape = 'u8[512]{0}', space=smem, size = 0x200, scoped, tag = 'output window, operand 0, single buffered']
    %7 = vsyncpa [#allocation4], 0
    %8 = vsyncpa [#allocation7], 0
    %9 = vsyncpa [#allocation5], 0
    // Predicated region
    $region2: #{tpu_custom_call.1} parent=1 // pred_check
      _
    $region3: #{tpu_custom_call.1} parent=1 // pred_check_branch
      %11 = sbr.rel (0) target = $region5
    $region4: #{tpu_custom_call.1} parent=1 // pred_region
      %s12 = sadd.s32 0, 0
      %s13 = smul.u32 2, %s12
      %s15 = ssub.s32 256, 256
      %16 = vsyncadd [#allocation4], %s15
      %s17 = smul.addr %s13, 128
      %s18 = scalar_lea.hbm %s0, %s17
      %s19 = sshll.u32 [#allocation3], 4
      %s20 = int_to_ptr.vmem [resolvable:$true] %s19
      %25 = dma.hbm_to_vmem [thread:$0]  %s18, 256, %s20, [#allocation4], 128, 128, 8
    $region5: #{tpu_custom_call.1} parent=1 // pred_fallthru
      _
    // Predicated region
    $region6: #{tpu_custom_call.1} parent=1 // pred_check
      _
    $region7: #{tpu_custom_call.1} parent=1 // pred_check_branch
      %27 = sbr.rel (0) target = $region9
    $region8: #{tpu_custom_call.1} parent=1 // pred_region
      %s28 = sadd.s32 0, 0
      %s29 = smul.u32 2, %s28
      %s31 = ssub.s32 256, 256
      %32 = vsyncadd [#allocation7], %s31
      %s33 = smul.addr %s29, 128
      %s34 = scalar_lea.hbm %s1, %s33
      %s35 = sshll.u32 [#allocation6], 4
      %s36 = int_to_ptr.vmem [resolvable:$true] %s35
      %41 = dma.hbm_to_vmem [thread:$0]  %s34, 256, %s36, [#allocation7], 128, 128, 8
    $region9: #{tpu_custom_call.1} parent=1 // pred_fallthru
      _
    // Predicated region
    $region10: #{tpu_custom_call.1} parent=1 // pred_check
      _
    $region11: #{tpu_custom_call.1} parent=1 // pred_check_branch
      %43 = sbr.rel (0) target = $region13
    $region12: #{tpu_custom_call.1} parent=1 // pred_region
      %44 = dma.done [#allocation4], 256
    $region13: #{tpu_custom_call.1} parent=1 // pred_fallthru
      _
    // Predicated region
    $region14: #{tpu_custom_call.1} parent=1 // pred_check
      _
    $region15: #{tpu_custom_call.1} parent=1 // pred_check_branch
      %46 = sbr.rel (0) target = $region17
    $region16: #{tpu_custom_call.1} parent=1 // pred_region
      %47 = dma.done [#allocation7], 256
    $region17: #{tpu_custom_call.1} parent=1 // pred_fallthru
      _
    %s48 = sadd.s32 0, 0
    %s49 = smul.u32 2, %s48
    %s50 = sadd.s32 0, 0
    %s51 = smul.u32 2, %s50
    %p52 = scmp.eq.s32.totalorder 0, 0
    // Predicated region
    $region18: #{tpu_custom_call.1} parent=1 // pred_check
      %p53 = pneg %p52
    $region19: #{tpu_custom_call.1} parent=1 // pred_check_branch
      %55 = sbr.rel (%p53) target = $region21
    $region20: #{tpu_custom_call.1} parent=1 // pred_region
      %56 = vst [vmem:[#allocation2] sm:$0xff] 0.0
    $region21: #{tpu_custom_call.1} parent=1 // pred_fallthru
      _
    %v57 = vld [vmem:[#allocation3] sm:$0xff]
    %v58 = vld [vmem:[#allocation3 + $0x8] sm:$0xff]
    %v59 = vld [vmem:[#allocation6] sm:$0xff]
    %v60 = vld [vmem:[#allocation6 + $0x8] sm:$0xff]
    %v61 = vsub.f32 %v57, %v59
    %v62 = vsub.f32 %v58, %v60
    %v63 = vand.u32 2147483647, %v61
    %v64 = vand.u32 2147483647, %v62
    %v65 = vld [vmem:[#allocation2] sm:$0xff]
    %v66 = vadd.f32 %v63, %v64
    %v67 = vadd.f32 %v65, %v66
    %68 = vst [vmem:[#allocation2] sm:$0xff] %v67
    // Predicated region
    $region22: #{tpu_custom_call.1} parent=1 // pred_check
      %p69 = pneg %p52
    $region23: #{tpu_custom_call.1} parent=1 // pred_check_branch
      %71 = sbr.rel (%p69) target = $region25
    $region24: #{tpu_custom_call.1} parent=1 // pred_region
      %v72 = vld [vmem:[#allocation2] sm:$0xff]
      %73 = vadd.xlane.f32.xlu0 %v72
      %v74 = vpop.xlane.xlu0 %73
      %v75 = vrot.slane %v74, 4
      %v76 = vadd.f32 %v74, %v75
      %v77 = vrot.slane %v76, 2
      %v78 = vadd.f32 %v76, %v77
      %v79 = vrot.slane %v78, 1
      %v80 = vadd.f32 %v78, %v79
      %s81 = vtos %v80
      %s82 = scalar_lea.smem [#allocation8], 0
      %83 = sst [smem:[%s82]] %s81
    $region25: #{tpu_custom_call.1} parent=1 // pred_fallthru
      _
    // Predicated region
    $region26: #{tpu_custom_call.1} parent=1 // pred_check
      _
    $region27: #{tpu_custom_call.1} parent=1 // pred_check_branch
      %85 = sbr.rel (0) target = $region29
    $region28: #{tpu_custom_call.1} parent=1 // pred_region
      %s87 = ssub.s32 16, 16
      %88 = vsyncadd [#allocation5], %s87
      %91 = dma.smem_to_hbm [#allocation8], 16, %s2, [#allocation5]
    $region29: #{tpu_custom_call.1} parent=1 // pred_fallthru
      _
    // Predicated region
    $region30: #{tpu_custom_call.1} parent=1 // pred_check
      _
    $region31: #{tpu_custom_call.1} parent=1 // pred_check_branch
      %93 = sbr.rel (0) target = $region33
    $region32: #{tpu_custom_call.1} parent=1 // pred_region
      %94 = dma.done [#allocation5], 16
    $region33: #{tpu_custom_call.1} parent=1 // pred_fallthru
      _
    %95 = sfence
    %96 = vsyncpa [#allocation4], 1
    %97 = vsyncpa [#allocation7], 1
    %98 = vsyncpa [#allocation5], 1

</llo_original>
